<compile_context>
chip_gen: v5e
topology: v5e:2x2
jax: 0.10.0
libtpu: 0.0.40
codegen_flags: <defaults>
</compile_context>

<pallas_src>
import math

import jax
import jax.numpy as jnp
from jax.experimental import pallas as pl
from jax.experimental.pallas import tpu as pltpu


def _mhsa_kernel(x_ref, wqkv_ref, bqkv_ref, out_ref, attn_ref):
    # x_ref    : (B, P, D)
    # wqkv_ref : (D, 3*D)   block-diagonal fused Q|K|V projection weight
    # bqkv_ref : (1, 3*D)   fused bias
    # out_ref  : (B, P, D)
    # attn_ref : (B, H, P, P)
    B, P, D = x_ref.shape
    H = attn_ref.shape[1]
    hd = D // H
    G = B * H
    scale = 1.0 / math.sqrt(hd)

    xf = x_ref[...].reshape(B * P, D).astype(jnp.float32)          # (B*P, D)
    w = wqkv_ref[...].astype(jnp.float32)                          # (D, 3D)
    b = bqkv_ref[...].astype(jnp.float32)                          # (1, 3D)

    # One MXU push covers every head's Q, K and V projection.
    qkv = jnp.dot(xf, w, preferred_element_type=jnp.float32) + b   # (B*P, 3D)

    def to_heads(base):
        # (B*P, 3D) column window -> (B*H, P, hd) with g = b*H + h.
        # Only the static lane slices move data; the reshapes/stack are
        # leading-dim regrouping (free).
        parts = [
            qkv[:, base + h * hd: base + (h + 1) * hd].reshape(B, P, hd)
            for h in range(H)
        ]
        return jnp.stack(parts, axis=1).reshape(G, P, hd)

    qg = to_heads(0) * scale        # fold 1/sqrt(hd) into q
    kg = to_heads(D)
    vg = to_heads(2 * D)

    # Batched scores over all (batch, head) pairs: one einsum, one softmax.
    s = jnp.einsum('gpd,gqd->gpq', qg, kg,
                   preferred_element_type=jnp.float32)              # (G, P, P)
    m = jnp.max(s, axis=-1, keepdims=True)
    e = jnp.exp(s - m)
    denom = jnp.sum(e, axis=-1, keepdims=True)
    attn = e * pl.reciprocal(denom, approx=False)                   # exact

    og = jnp.einsum('gpq,gqd->gpd', attn, vg,
                    preferred_element_type=jnp.float32)             # (G, P, hd)

    # attn: leading-dim reshape only, single whole-ref store.
    attn_ref[...] = attn.reshape(B, H, P, P).astype(attn_ref.dtype)

    # out: write each head straight into its lane slice (no concatenate).
    o4 = og.reshape(B, H, P, hd)
    for h in range(H):
        out_ref[:, :, h * hd:(h + 1) * hd] = o4[:, h].astype(out_ref.dtype)


def _block_diag_t(w):
    """(H, hd, hd) nn.Linear weights (out,in) -> (D, D) block-diag of w[h].T."""
    H, hd, _ = w.shape
    D = H * hd
    out = jnp.zeros((D, D), w.dtype)
    for h in range(H):
        out = out.at[h * hd:(h + 1) * hd, h * hd:(h + 1) * hd].set(w[h].T)
    return out


def multi_head_self_attention(x, wq, wk, wv, bq, bk, bv):
    """x: [B, P, D]; wq/wk/wv: [H, hd, hd]; bq/bk/bv: [H, hd].

    Returns (out [B, P, D], attn [B, H, P, P]) matching the torch module.
    """
    B, P, D = x.shape
    H, hd, _ = wq.shape
    assert D == H * hd

    # Fused block-diagonal projection: head h's input slice maps only to head
    # h's Q/K/V output columns, so one (D, 3D) matmul reproduces the 12 small
    # per-head nn.Linear projections exactly (extra terms are exact zeros).
    wqkv = jnp.concatenate(
        [_block_diag_t(wq), _block_diag_t(wk), _block_diag_t(wv)], axis=1)
    bqkv = jnp.concatenate(
        [bq.reshape(-1), bk.reshape(-1), bv.reshape(-1)]).reshape(1, 3 * D)

    out, attn = pl.pallas_call(
        _mhsa_kernel,
        out_shape=(
            jax.ShapeDtypeStruct((B, P, D), x.dtype),
            jax.ShapeDtypeStruct((B, H, P, P), x.dtype),
        ),
        grid_spec=pltpu.PrefetchScalarGridSpec(
            num_scalar_prefetch=0,
            grid=(1,),  # single step: whole problem fits trivially in VMEM
            in_specs=[
                pl.BlockSpec((B, P, D), lambda i: (0, 0, 0)),
                pl.BlockSpec((D, 3 * D), lambda i: (0, 0)),
                pl.BlockSpec((1, 3 * D), lambda i: (0, 0)),
            ],
            out_specs=[
                pl.BlockSpec((B, P, D), lambda i: (0, 0, 0)),
                pl.BlockSpec((B, H, P, P), lambda i: (0, 0, 0, 0)),
            ],
        ),
        compiler_params=pltpu.CompilerParams(
            dimension_semantics=("arbitrary",)),
    )(x, wqkv, bqkv)
    return out, attn


def _reference(x, wq, wk, wv, bq, bk, bv):
    """Pure-JAX reference mirroring the torch module loop semantics."""
    B, P, D = x.shape
    H, hd, _ = wq.shape
    outs, attns = [], []
    for b in range(B):
        head_outs, head_attns = [], []
        for h in range(H):
            xs = x[b, :, h * hd:(h + 1) * hd]
            q = xs @ wq[h].T + bq[h]
            k = xs @ wk[h].T + bk[h]
            v = xs @ wv[h].T + bv[h]
            s = q @ k.T / math.sqrt(hd)
            a = jax.nn.softmax(s, axis=-1)
            head_attns.append(a)
            head_outs.append(a @ v)
        outs.append(jnp.concatenate(head_outs, axis=-1))
        attns.append(jnp.stack(head_attns, axis=0))
    return jnp.stack(outs, axis=0), jnp.stack(attns, axis=0)


if __name__ == "__main__":
    # module config: input_dimension=32, amount_of_heads=4 -> head_dimension=8
    B, P, D, H = 2, 8, 32, 4
    hd = D // H

    key = jax.random.PRNGKey(0)
    kx, kq, kk, kv, kbq, kbk, kbv = jax.random.split(key, 7)

    x = jax.random.normal(kx, (B, P, D), dtype=jnp.float32)

    # deterministic nn.Linear-style init: U(-1/sqrt(in), 1/sqrt(in))
    bound = 1.0 / math.sqrt(hd)
    wq = jax.random.uniform(kq, (H, hd, hd), jnp.float32, -bound, bound)
    wk = jax.random.uniform(kk, (H, hd, hd), jnp.float32, -bound, bound)
    wv = jax.random.uniform(kv, (H, hd, hd), jnp.float32, -bound, bound)
    bq = jax.random.uniform(kbq, (H, hd), jnp.float32, -bound, bound)
    bk = jax.random.uniform(kbk, (H, hd), jnp.float32, -bound, bound)
    bv = jax.random.uniform(kbv, (H, hd), jnp.float32, -bound, bound)

    out, attn = multi_head_self_attention(x, wq, wk, wv, bq, bk, bv)
    jax.block_until_ready((out, attn))

    ref_out, ref_attn = _reference(x, wq, wk, wv, bq, bk, bv)
    assert out.shape == (B, P, D) and attn.shape == (B, H, P, P)
    assert jnp.allclose(out, ref_out, atol=1e-5, rtol=1e-5)
    assert jnp.allclose(attn, ref_attn, atol=1e-5, rtol=1e-5)

    print("KERNEL_OK")
</pallas_src>

<mosaic_0001>
module attributes {stable_mosaic.version = 11 : i64} {
  func.func @_mhsa_kernel(%arg0: i32, %arg1: memref<2x8x32xf32, #tpu.memory_space<vmem>>, %arg2: memref<32x96xf32, #tpu.memory_space<vmem>>, %arg3: memref<1x96xf32, #tpu.memory_space<vmem>>, %arg4: memref<2x8x32xf32, #tpu.memory_space<vmem>>, %arg5: memref<2x4x8x8xf32, #tpu.memory_space<vmem>>) attributes {dimension_semantics = [#tpu.dimension_semantics<arbitrary>], iteration_bounds = array<i64: 1>, scalar_prefetch = 0 : i64, scratch_operands = 0 : i64, tpu.core_type = #tpu.core_type<tc>, window_params = [{pipeline_mode = #tpu.pipeline_mode<synchronous>, transform_indices = @transform_0, window_bounds = array<i64: 2, 8, 32>}, {pipeline_mode = #tpu.pipeline_mode<synchronous>, transform_indices = @transform_1, window_bounds = array<i64: 32, 96>}, {pipeline_mode = #tpu.pipeline_mode<synchronous>, transform_indices = @transform_2, window_bounds = array<i64: 1, 96>}, {pipeline_mode = #tpu.pipeline_mode<synchronous>, transform_indices = @transform_3, window_bounds = array<i64: 2, 8, 32>}, {pipeline_mode = #tpu.pipeline_mode<synchronous>, transform_indices = @transform_4, window_bounds = array<i64: 2, 4, 8, 8>}]} {
    %c0 = arith.constant 0 : index
    %c0_0 = arith.constant 0 : index
    %c0_1 = arith.constant 0 : index
    %0 = vector.load %arg1[%c0, %c0_0, %c0_1] : memref<2x8x32xf32, #tpu.memory_space<vmem>>, vector<2x8x32xf32>
    %1 = vector.shape_cast %0 : vector<2x8x32xf32> to vector<16x32xf32>
    %c0_2 = arith.constant 0 : index
    %c0_3 = arith.constant 0 : index
    %2 = vector.load %arg2[%c0_2, %c0_3] : memref<32x96xf32, #tpu.memory_space<vmem>>, vector<32x96xf32>
    %c0_4 = arith.constant 0 : index
    %c0_5 = arith.constant 0 : index
    %3 = vector.load %arg3[%c0_4, %c0_5] : memref<1x96xf32, #tpu.memory_space<vmem>>, vector<1x96xf32>
    %cst = arith.constant dense<0.000000e+00> : vector<16x96xf32>
    %4 = tpu.matmul %1, %2, %cst {dimension_numbers = #tpu.dot_dimension_numbers<[1], [0], [0], [1], [0, 0, 1, 1], [], []>} : vector<16x32xf32>, vector<32x96xf32>, vector<16x96xf32> -> vector<16x96xf32>
    %5 = vector.broadcast %3 : vector<1x96xf32> to vector<16x96xf32>
    %6 = arith.addf %4, %5 : vector<16x96xf32>
    %7 = vector.extract_strided_slice %6 {offsets = [0, 0], sizes = [16, 8], strides = [1, 1]} : vector<16x96xf32> to vector<16x8xf32>
    %8 = vector.shape_cast %7 : vector<16x8xf32> to vector<2x8x8xf32>
    %9 = vector.extract_strided_slice %6 {offsets = [0, 8], sizes = [16, 8], strides = [1, 1]} : vector<16x96xf32> to vector<16x8xf32>
    %10 = vector.shape_cast %9 : vector<16x8xf32> to vector<2x8x8xf32>
    %11 = vector.extract_strided_slice %6 {offsets = [0, 16], sizes = [16, 8], strides = [1, 1]} : vector<16x96xf32> to vector<16x8xf32>
    %12 = vector.shape_cast %11 : vector<16x8xf32> to vector<2x8x8xf32>
    %13 = vector.extract_strided_slice %6 {offsets = [0, 24], sizes = [16, 8], strides = [1, 1]} : vector<16x96xf32> to vector<16x8xf32>
    %14 = vector.shape_cast %13 : vector<16x8xf32> to vector<2x8x8xf32>
    %15 = vector.shape_cast %8 : vector<2x8x8xf32> to vector<2x1x8x8xf32>
    %16 = vector.shape_cast %10 : vector<2x8x8xf32> to vector<2x1x8x8xf32>
    %17 = vector.shape_cast %12 : vector<2x8x8xf32> to vector<2x1x8x8xf32>
    %18 = vector.shape_cast %14 : vector<2x8x8xf32> to vector<2x1x8x8xf32>
    %19 = tpu.concatenate %15, %16, %17, %18 in 1 : vector<2x1x8x8xf32>, vector<2x1x8x8xf32>, vector<2x1x8x8xf32>, vector<2x1x8x8xf32> -> vector<2x4x8x8xf32>
    %20 = vector.shape_cast %19 : vector<2x4x8x8xf32> to vector<8x8x8xf32>
    %cst_6 = arith.constant 0.353553385 : f32
    %21 = vector.broadcast %cst_6 : f32 to vector<8x8x8xf32>
    %22 = arith.mulf %20, %21 : vector<8x8x8xf32>
    %23 = vector.extract_strided_slice %6 {offsets = [0, 32], sizes = [16, 8], strides = [1, 1]} : vector<16x96xf32> to vector<16x8xf32>
    %24 = vector.shape_cast %23 : vector<16x8xf32> to vector<2x8x8xf32>
    %25 = vector.extract_strided_slice %6 {offsets = [0, 40], sizes = [16, 8], strides = [1, 1]} : vector<16x96xf32> to vector<16x8xf32>
    %26 = vector.shape_cast %25 : vector<16x8xf32> to vector<2x8x8xf32>
    %27 = vector.extract_strided_slice %6 {offsets = [0, 48], sizes = [16, 8], strides = [1, 1]} : vector<16x96xf32> to vector<16x8xf32>
    %28 = vector.shape_cast %27 : vector<16x8xf32> to vector<2x8x8xf32>
    %29 = vector.extract_strided_slice %6 {offsets = [0, 56], sizes = [16, 8], strides = [1, 1]} : vector<16x96xf32> to vector<16x8xf32>
    %30 = vector.shape_cast %29 : vector<16x8xf32> to vector<2x8x8xf32>
    %31 = vector.shape_cast %24 : vector<2x8x8xf32> to vector<2x1x8x8xf32>
    %32 = vector.shape_cast %26 : vector<2x8x8xf32> to vector<2x1x8x8xf32>
    %33 = vector.shape_cast %28 : vector<2x8x8xf32> to vector<2x1x8x8xf32>
    %34 = vector.shape_cast %30 : vector<2x8x8xf32> to vector<2x1x8x8xf32>
    %35 = tpu.concatenate %31, %32, %33, %34 in 1 : vector<2x1x8x8xf32>, vector<2x1x8x8xf32>, vector<2x1x8x8xf32>, vector<2x1x8x8xf32> -> vector<2x4x8x8xf32>
    %36 = vector.shape_cast %35 : vector<2x4x8x8xf32> to vector<8x8x8xf32>
    %37 = vector.extract_strided_slice %6 {offsets = [0, 64], sizes = [16, 8], strides = [1, 1]} : vector<16x96xf32> to vector<16x8xf32>
    %38 = vector.shape_cast %37 : vector<16x8xf32> to vector<2x8x8xf32>
    %39 = vector.extract_strided_slice %6 {offsets = [0, 72], sizes = [16, 8], strides = [1, 1]} : vector<16x96xf32> to vector<16x8xf32>
    %40 = vector.shape_cast %39 : vector<16x8xf32> to vector<2x8x8xf32>
    %41 = vector.extract_strided_slice %6 {offsets = [0, 80], sizes = [16, 8], strides = [1, 1]} : vector<16x96xf32> to vector<16x8xf32>
    %42 = vector.shape_cast %41 : vector<16x8xf32> to vector<2x8x8xf32>
    %43 = vector.extract_strided_slice %6 {offsets = [0, 88], sizes = [16, 8], strides = [1, 1]} : vector<16x96xf32> to vector<16x8xf32>
    %44 = vector.shape_cast %43 : vector<16x8xf32> to vector<2x8x8xf32>
    %45 = vector.shape_cast %38 : vector<2x8x8xf32> to vector<2x1x8x8xf32>
    %46 = vector.shape_cast %40 : vector<2x8x8xf32> to vector<2x1x8x8xf32>
    %47 = vector.shape_cast %42 : vector<2x8x8xf32> to vector<2x1x8x8xf32>
    %48 = vector.shape_cast %44 : vector<2x8x8xf32> to vector<2x1x8x8xf32>
    %49 = tpu.concatenate %45, %46, %47, %48 in 1 : vector<2x1x8x8xf32>, vector<2x1x8x8xf32>, vector<2x1x8x8xf32>, vector<2x1x8x8xf32> -> vector<2x4x8x8xf32>
    %50 = vector.shape_cast %49 : vector<2x4x8x8xf32> to vector<8x8x8xf32>
    "tpu.trace_start"() <{level = 10 : i32, message = "gpd,gqd->gpq"}> : () -> ()
    %cst_7 = arith.constant dense<0.000000e+00> : vector<8x8x8xf32>
    %51 = tpu.matmul %22, %36, %cst_7 {dimension_numbers = #tpu.dot_dimension_numbers<[2], [2], [1], [1], [0, 0, 0, 1, 1, 1], [0], [0]>} : vector<8x8x8xf32>, vector<8x8x8xf32>, vector<8x8x8xf32> -> vector<8x8x8xf32>
    "tpu.trace_stop"() : () -> ()
    %cst_8 = arith.constant dense<0xFF800000> : vector<8x8xf32>
    %52 = vector.multi_reduction <maximumf>, %51, %cst_8 [2] : vector<8x8x8xf32> to vector<8x8xf32>
    %53 = vector.shape_cast %52 : vector<8x8xf32> to vector<8x8x1xf32>
    %54 = vector.broadcast %53 : vector<8x8x1xf32> to vector<8x8x8xf32>
    %55 = arith.subf %51, %54 : vector<8x8x8xf32>
    %56 = math.exp %55 : vector<8x8x8xf32>
    %cst_9 = arith.constant dense<0.000000e+00> : vector<8x8xf32>
    %57 = vector.multi_reduction <add>, %56, %cst_9 [2] : vector<8x8x8xf32> to vector<8x8xf32>
    %58 = vector.shape_cast %57 : vector<8x8xf32> to vector<8x8x1xf32>
    %59 = tpu.reciprocal %58 : vector<8x8x1xf32> -> vector<8x8x1xf32>
    %60 = vector.broadcast %59 : vector<8x8x1xf32> to vector<8x8x8xf32>
    %61 = arith.mulf %56, %60 : vector<8x8x8xf32>
    "tpu.trace_start"() <{level = 10 : i32, message = "gpq,gqd->gpd"}> : () -> ()
    %cst_10 = arith.constant dense<0.000000e+00> : vector<8x8x8xf32>
    %62 = tpu.matmul %61, %50, %cst_10 {dimension_numbers = #tpu.dot_dimension_numbers<[2], [1], [1], [2], [0, 0, 0, 1, 1, 2], [0], [0]>} : vector<8x8x8xf32>, vector<8x8x8xf32>, vector<8x8x8xf32> -> vector<8x8x8xf32>
    "tpu.trace_stop"() : () -> ()
    %63 = vector.shape_cast %61 : vector<8x8x8xf32> to vector<2x4x8x8xf32>
    %c0_11 = arith.constant 0 : index
    %c0_12 = arith.constant 0 : index
    %c0_13 = arith.constant 0 : index
    %c0_14 = arith.constant 0 : index
    %64 = vector.load %arg5[%c0_11, %c0_12, %c0_13, %c0_14] : memref<2x4x8x8xf32, #tpu.memory_space<vmem>>, vector<2x4x8x8xf32>
    tpu.vector_store %arg5[%c0_11, %c0_12, %c0_13, %c0_14], %63 {strides = array<i32>} : memref<2x4x8x8xf32, #tpu.memory_space<vmem>>, vector<2x4x8x8xf32>,
    %65 = vector.shape_cast %62 : vector<8x8x8xf32> to vector<2x4x8x8xf32>
    %66 = vector.extract_strided_slice %65 {offsets = [0, 0, 0, 0], sizes = [2, 1, 8, 8], strides = [1, 1, 1, 1]} : vector<2x4x8x8xf32> to vector<2x1x8x8xf32>
    %67 = vector.shape_cast %66 : vector<2x1x8x8xf32> to vector<2x8x8xf32>
    %c0_15 = arith.constant 0 : index
    %c0_16 = arith.constant 0 : index
    %c0_17 = arith.constant 0 : index
    %68 = vector.load %arg4[%c0_15, %c0_16, %c0_17] : memref<2x8x32xf32, #tpu.memory_space<vmem>>, vector<2x8x8xf32>
    tpu.vector_store %arg4[%c0_15, %c0_16, %c0_17], %67 {strides = array<i32>} : memref<2x8x32xf32, #tpu.memory_space<vmem>>, vector<2x8x8xf32>,
    %69 = vector.extract_strided_slice %65 {offsets = [0, 1, 0, 0], sizes = [2, 1, 8, 8], strides = [1, 1, 1, 1]} : vector<2x4x8x8xf32> to vector<2x1x8x8xf32>
    %70 = vector.shape_cast %69 : vector<2x1x8x8xf32> to vector<2x8x8xf32>
    %c0_18 = arith.constant 0 : index
    %c0_19 = arith.constant 0 : index
    %c8 = arith.constant 8 : index
    %71 = vector.load %arg4[%c0_18, %c0_19, %c8] : memref<2x8x32xf32, #tpu.memory_space<vmem>>, vector<2x8x8xf32>
    tpu.vector_store %arg4[%c0_18, %c0_19, %c8], %70 {strides = array<i32>} : memref<2x8x32xf32, #tpu.memory_space<vmem>>, vector<2x8x8xf32>,
    %72 = vector.extract_strided_slice %65 {offsets = [0, 2, 0, 0], sizes = [2, 1, 8, 8], strides = [1, 1, 1, 1]} : vector<2x4x8x8xf32> to vector<2x1x8x8xf32>
    %73 = vector.shape_cast %72 : vector<2x1x8x8xf32> to vector<2x8x8xf32>
    %c0_20 = arith.constant 0 : index
    %c0_21 = arith.constant 0 : index
    %c16 = arith.constant 16 : index
    %74 = vector.load %arg4[%c0_20, %c0_21, %c16] : memref<2x8x32xf32, #tpu.memory_space<vmem>>, vector<2x8x8xf32>
    tpu.vector_store %arg4[%c0_20, %c0_21, %c16], %73 {strides = array<i32>} : memref<2x8x32xf32, #tpu.memory_space<vmem>>, vector<2x8x8xf32>,
    %75 = vector.extract_strided_slice %65 {offsets = [0, 3, 0, 0], sizes = [2, 1, 8, 8], strides = [1, 1, 1, 1]} : vector<2x4x8x8xf32> to vector<2x1x8x8xf32>
    %76 = vector.shape_cast %75 : vector<2x1x8x8xf32> to vector<2x8x8xf32>
    %c0_22 = arith.constant 0 : index
    %c0_23 = arith.constant 0 : index
    %c24 = arith.constant 24 : index
    %77 = vector.load %arg4[%c0_22, %c0_23, %c24] : memref<2x8x32xf32, #tpu.memory_space<vmem>>, vector<2x8x8xf32>
    tpu.vector_store %arg4[%c0_22, %c0_23, %c24], %76 {strides = array<i32>} : memref<2x8x32xf32, #tpu.memory_space<vmem>>, vector<2x8x8xf32>,
    return
  }
  func.func @transform_0(%arg0: i32) -> (i32, i32, i32) {
    %c0_i32 = arith.constant 0 : i32
    %c0_i32_0 = arith.constant 0 : i32
    %c0_i32_1 = arith.constant 0 : i32
    %c0_i32_2 = arith.constant 0 : i32
    return %c0_i32, %c0_i32_0, %c0_i32_1 : i32, i32, i32
  }
  func.func @transform_1(%arg0: i32) -> (i32, i32) {
    %c0_i32 = arith.constant 0 : i32
    %c0_i32_0 = arith.constant 0 : i32
    %c0_i32_1 = arith.constant 0 : i32
    return %c0_i32, %c0_i32_0 : i32, i32
  }
  func.func @transform_2(%arg0: i32) -> (i32, i32) {
    %c0_i32 = arith.constant 0 : i32
    %c0_i32_0 = arith.constant 0 : i32
    %c0_i32_1 = arith.constant 0 : i32
    return %c0_i32, %c0_i32_0 : i32, i32
  }
  func.func @transform_3(%arg0: i32) -> (i32, i32, i32) {
    %c0_i32 = arith.constant 0 : i32
    %c0_i32_0 = arith.constant 0 : i32
    %c0_i32_1 = arith.constant 0 : i32
    %c0_i32_2 = arith.constant 0 : i32
    return %c0_i32, %c0_i32_0, %c0_i32_1 : i32, i32, i32
  }
  func.func @transform_4(%arg0: i32) -> (i32, i32, i32, i32) {
    %c0_i32 = arith.constant 0 : i32
    %c0_i32_0 = arith.constant 0 : i32
    %c0_i32_1 = arith.constant 0 : i32
    %c0_i32_2 = arith.constant 0 : i32
    %c0_i32_3 = arith.constant 0 : i32
    return %c0_i32, %c0_i32_0, %c0_i32_1, %c0_i32_2 : i32, i32, i32, i32
  }
}

</mosaic_0001>

<llo_original>
// kernel: tpu_custom_call.1
$region0: #{tpu_custom_call.1}
  #allocation0 [shape = 'u32[]', space=smem, size = 0x4, offset = 0x4, fixed_abs, tag = 'smem constant byte address 0x4 - core index']
  #allocation1 [shape = 'u32[72,128]{1,0:T(1,128)}', space=vmem, size = 0x9000, scoped, tag = 'internal scratch']
  %s0 = inlined_call_operand.hbm [shape: f32[2,8,32], index: 0, kind: input, shape index: {}]
  %s1 = inlined_call_operand.hbm [shape: f32[32,96], index: 1, kind: input, shape index: {}]
  %s2 = inlined_call_operand.vmem [shape: f32[1,96], index: 2, kind: input, shape index: {}]
  %s3 = inlined_call_operand.hbm [shape: f32[2,8,32], index: 3, kind: output, shape index: {0}]
  %s4 = inlined_call_operand.hbm [shape: f32[2,4,8,8], index: 4, kind: output, shape index: {1}]
  %5 = xla_tuple %s3, %s4
  %s6 = sld [smem:[#allocation0]]
  $region38: #{tpu_custom_call.1} parent=0
    _
  %s8 = ssub.s32 1, %s6
  %s9 = scalar_select 0, %s8, %s6
  $region1: #{tpu_custom_call.1} parent=0
    #allocation2 [shape = 'u8[8192]{0}', space=vmem, size = 0x2000, scoped, tag = 'input window, operand 0, single buffered']
    #allocation3 [shape = 's32[1]{0}', space=sflag, size = 0x4, scoped, tag = 'scoped memory for tpu_custom_call.1']
    #allocation4 [shape = 's32[1]{0}', space=sflag, size = 0x4, scoped, tag = 'scoped memory for tpu_custom_call.1']
    #allocation5 [shape = 'u8[16384]{0}', space=vmem, size = 0x4000, scoped, tag = 'input window, operand 1, single buffered']
    #allocation6 [shape = 's32[1]{0}', space=sflag, size = 0x4, scoped, tag = 'scoped memory for tpu_custom_call.1']
    #allocation7 [shape = 'u8[8192]{0}', space=vmem, size = 0x2000, scoped, tag = 'output window, operand 0, single buffered']
    #allocation8 [shape = 'u8[32768]{0}', space=vmem, size = 0x8000, scoped, tag = 'output window, operand 1, single buffered']
    #allocation9 [shape = 's32[1]{0}', space=sflag, size = 0x4, scoped, tag = 'scoped memory for tpu_custom_call.1']
    %10 = vsyncpa [#allocation3], 0
    %11 = vsyncpa [#allocation6], 0
    %12 = vsyncpa [#allocation4], 0
    %13 = vsyncpa [#allocation9], 0
    // Predicated region
    $region2: #{tpu_custom_call.1} parent=1 // pred_check
      _
    $region3: #{tpu_custom_call.1} parent=1 // pred_check_branch
      %15 = sbr.rel (0) target = $region5
    $region4: #{tpu_custom_call.1} parent=1 // pred_region
      %17 = vsyncadd [#allocation3], 0
      %s18 = sshll.u32 %s0, 4
      %s19 = int_to_ptr.hbm [resolvable:$true] %s18
      %s20 = sshll.u32 [#allocation2], 4
      %s21 = int_to_ptr.vmem [resolvable:$true] %s20
      %26 = dma.hbm_to_vmem [thread:$0]  %s19, 256, %s21, [#allocation3], 128, 128, 8
    $region5: #{tpu_custom_call.1} parent=1 // pred_fallthru
      _
    // Predicated region
    $region6: #{tpu_custom_call.1} parent=1 // pred_check
      _
    $region7: #{tpu_custom_call.1} parent=1 // pred_check_branch
      %28 = sbr.rel (0) target = $region9
    $region8: #{tpu_custom_call.1} parent=1 // pred_region
      %30 = vsyncadd [#allocation6], 0
      %s31 = sshll.u32 %s1, 4
      %s32 = int_to_ptr.hbm [resolvable:$true] %s31
      %s33 = sshll.u32 [#allocation5], 4
      %s34 = int_to_ptr.vmem [resolvable:$true] %s33
      %39 = dma.hbm_to_vmem [thread:$0]  %s32, 512, %s34, [#allocation6], 128, 128, 8
    $region9: #{tpu_custom_call.1} parent=1 // pred_fallthru
      _
    // Predicated region
    $region10: #{tpu_custom_call.1} parent=1 // pred_check
      _
    $region11: #{tpu_custom_call.1} parent=1 // pred_check_branch
      %41 = sbr.rel (0) target = $region13
    $region12: #{tpu_custom_call.1} parent=1 // pred_region
      _
    $region13: #{tpu_custom_call.1} parent=1 // pred_fallthru
      _
    // Predicated region
    $region14: #{tpu_custom_call.1} parent=1 // pred_check
      _
    $region15: #{tpu_custom_call.1} parent=1 // pred_check_branch
      %43 = sbr.rel (0) target = $region17
    $region16: #{tpu_custom_call.1} parent=1 // pred_region
      %45 = dma.done [#allocation3], 256
    $region17: #{tpu_custom_call.1} parent=1 // pred_fallthru
      _
    // Predicated region
    $region18: #{tpu_custom_call.1} parent=1 // pred_check
      _
    $region19: #{tpu_custom_call.1} parent=1 // pred_check_branch
      %47 = sbr.rel (0) target = $region21
    $region20: #{tpu_custom_call.1} parent=1 // pred_region
      %49 = dma.done [#allocation6], 512
    $region21: #{tpu_custom_call.1} parent=1 // pred_fallthru
      _
    %v50 = vld [vmem:[#allocation2] sm:$0xff]
    %v51 = vld [vmem:[#allocation2 + $0x8] sm:$0xff]
    %v52 = vld [vmem:[#allocation5] sm:$0xff]
    %v53 = vld [vmem:[#allocation5 + $0x8] sm:$0xff]
    %v54 = vld [vmem:[#allocation5 + $0x10] sm:$0xff]
    %v55 = vld [vmem:[#allocation5 + $0x18] sm:$0xff]
    %v56 = vld [vmem:[%s2] sm:$0x1]
    %v58 = vperm.slane %v56, 0
    %vm60 = vcmask 261120
    %v62 = vsel %vm60, %v50, 0
    %v65 = vsel %vm60, %v51, 0
    %67 = vmatpush.msra.mxu0 0.0
    %68 = vmatpush.msra.mxu0 0.0
    %69 = vmatpush.msra.mxu0 0.0
    %70 = vmatpush.msra.mxu0 0.0
    %71 = vmatpush.msra.mxu0 0.0
    %72 = vmatpush.msra.mxu0 0.0
    %73 = vmatpush.msra.mxu0 0.0
    %74 = vmatpush.msra.mxu0 0.0
    %75 = vmatpush.msra.mxu0 0.0
    %76 = vmatpush.msra.mxu0 0.0
    %77 = vmatpush.msra.mxu0 0.0
    %78 = vmatpush.msra.mxu0 0.0
    %79 = vmatpush.msra.mxu0 %v55
    %80 = vmatpush.msra.mxu0 %v54
    %81 = vmatpush.msra.mxu0 %v53
    %82 = vmatpush.msra.mxu0 %v52
    %83 = vmatmul.f32.gmra.mxu0 %v62
    %v84 = vpop.f32.mrf.mxu0
    %v85 = vadd.f32 %v58, %v84
    %86 = vmatmul.f32.gmra.mxu0 %v65
    %v87 = vpop.f32.mrf.mxu0
    %v88 = vadd.f32 %v58, %v87
    %89 = vdwg.mxu0
    %92 = vrot.lane.b32.xlu0 %v85, 120
    %v93 = vpop.permute.xlu0 %92
    %94 = vrot.lane.b32.xlu0 %v88, 120
    %v95 = vpop.permute.xlu0 %94
    %98 = vrot.lane.b32.xlu0 %v85, 112
    %v99 = vpop.permute.xlu0 %98
    %100 = vrot.lane.b32.xlu0 %v88, 112
    %v101 = vpop.permute.xlu0 %100
    %104 = vrot.lane.b32.xlu0 %v85, 104
    %v105 = vpop.permute.xlu0 %104
    %106 = vrot.lane.b32.xlu0 %v88, 104
    %v107 = vpop.permute.xlu0 %106
    %v110 = vmul.f32 %v85, 0.35355338
    %v111 = vmul.f32 %v93, 0.35355338
    %v112 = vmul.f32 %v99, 0.35355338
    %v113 = vmul.f32 %v105, 0.35355338
    %v114 = vmul.f32 %v88, 0.35355338
    %v115 = vmul.f32 %v95, 0.35355338
    %v116 = vmul.f32 %v101, 0.35355338
    %v117 = vmul.f32 %v107, 0.35355338
    %118 = vrot.lane.b32.xlu0 %v85, 96
    %v119 = vpop.permute.xlu0 %118
    %vm120 = vcmask 64512
    %v122 = vsel %vm120, %v110, 0
    %v124 = vsel %vm120, %v119, 0
    %126 = vmatpush.xpose.msra.mxu0 0.0
    %127 = vmatpush.xpose.msra.mxu0 0.0
    %128 = vmatpush.xpose.msra.mxu0 0.0
    %129 = vmatpush.xpose.msra.mxu0 0.0
    %130 = vmatpush.xpose.msra.mxu0 0.0
    %131 = vmatpush.xpose.msra.mxu0 0.0
    %132 = vmatpush.xpose.msra.mxu0 0.0
    %133 = vmatpush.xpose.msra.mxu0 0.0
    %134 = vmatpush.xpose.msra.mxu0 0.0
    %135 = vmatpush.xpose.msra.mxu0 0.0
    %136 = vmatpush.xpose.msra.mxu0 0.0
    %137 = vmatpush.xpose.msra.mxu0 0.0
    %138 = vmatpush.xpose.msra.mxu0 0.0
    %139 = vmatpush.xpose.msra.mxu0 0.0
    %140 = vmatpush.xpose.msra.mxu0 0.0
    %141 = vmatpush.xpose.msra.mxu0 %v124
    %142 = vmatmul.f32.gmra.mxu0 %v122
    %v143 = vpop.f32.mrf.mxu0
    %v144 = vadd.f32 0.0, %v143
    %145 = vdwg.mxu0
    %146 = vrot.lane.b32.xlu0 %v93, 96
    %v147 = vpop.permute.xlu0 %146
    %v149 = vsel %vm120, %v111, 0
    %v151 = vsel %vm120, %v147, 0
    %153 = vmatpush.xpose.msra.mxu0 0.0
    %154 = vmatpush.xpose.msra.mxu0 0.0
    %155 = vmatpush.xpose.msra.mxu0 0.0
    %156 = vmatpush.xpose.msra.mxu0 0.0
    %157 = vmatpush.xpose.msra.mxu0 0.0
    %158 = vmatpush.xpose.msra.mxu0 0.0
    %159 = vmatpush.xpose.msra.mxu0 0.0
    %160 = vmatpush.xpose.msra.mxu0 0.0
    %161 = vmatpush.xpose.msra.mxu0 0.0
    %162 = vmatpush.xpose.msra.mxu0 0.0
    %163 = vmatpush.xpose.msra.mxu0 0.0
    %164 = vmatpush.xpose.msra.mxu0 0.0
    %165 = vmatpush.xpose.msra.mxu0 0.0
    %166 = vmatpush.xpose.msra.mxu0 0.0
    %167 = vmatpush.xpose.msra.mxu0 0.0
    %168 = vmatpush.xpose.msra.mxu0 %v151
    %169 = vmatmul.f32.gmra.mxu0 %v149
    %v170 = vpop.f32.mrf.mxu0
    %v171 = vadd.f32 0.0, %v170
    %172 = vdwg.mxu0
    %173 = vrot.lane.b32.xlu0 %v99, 96
    %v174 = vpop.permute.xlu0 %173
    %v176 = vsel %vm120, %v112, 0
    %v178 = vsel %vm120, %v174, 0
    %180 = vmatpush.xpose.msra.mxu0 0.0
    %181 = vmatpush.xpose.msra.mxu0 0.0
    %182 = vmatpush.xpose.msra.mxu0 0.0
    %183 = vmatpush.xpose.msra.mxu0 0.0
    %184 = vmatpush.xpose.msra.mxu0 0.0
    %185 = vmatpush.xpose.msra.mxu0 0.0
    %186 = vmatpush.xpose.msra.mxu0 0.0
    %187 = vmatpush.xpose.msra.mxu0 0.0
    %188 = vmatpush.xpose.msra.mxu0 0.0
    %189 = vmatpush.xpose.msra.mxu0 0.0
    %190 = vmatpush.xpose.msra.mxu0 0.0
    %191 = vmatpush.xpose.msra.mxu0 0.0
    %192 = vmatpush.xpose.msra.mxu0 0.0
    %193 = vmatpush.xpose.msra.mxu0 0.0
    %194 = vmatpush.xpose.msra.mxu0 0.0
    %195 = vmatpush.xpose.msra.mxu0 %v178
    %196 = vmatmul.f32.gmra.mxu0 %v176
    %v197 = vpop.f32.mrf.mxu0
    %v198 = vadd.f32 0.0, %v197
    %199 = vdwg.mxu0
    %200 = vrot.lane.b32.xlu0 %v105, 96
    %v201 = vpop.permute.xlu0 %200
    %v203 = vsel %vm120, %v113, 0
    %v205 = vsel %vm120, %v201, 0
    %207 = vmatpush.xpose.msra.mxu0 0.0
    %208 = vmatpush.xpose.msra.mxu0 0.0
    %209 = vmatpush.xpose.msra.mxu0 0.0
    %210 = vmatpush.xpose.msra.mxu0 0.0
    %211 = vmatpush.xpose.msra.mxu0 0.0
    %212 = vmatpush.xpose.msra.mxu0 0.0
    %213 = vmatpush.xpose.msra.mxu0 0.0
    %214 = vmatpush.xpose.msra.mxu0 0.0
    %215 = vmatpush.xpose.msra.mxu0 0.0
    %216 = vmatpush.xpose.msra.mxu0 0.0
    %217 = vmatpush.xpose.msra.mxu0 0.0
    %218 = vmatpush.xpose.msra.mxu0 0.0
    %219 = vmatpush.xpose.msra.mxu0 0.0
    %220 = vmatpush.xpose.msra.mxu0 0.0
    %221 = vmatpush.xpose.msra.mxu0 0.0
    %222 = vmatpush.xpose.msra.mxu0 %v205
    %223 = vmatmul.f32.gmra.mxu0 %v203
    %v224 = vpop.f32.mrf.mxu0
    %v225 = vadd.f32 0.0, %v224
    %226 = vdwg.mxu0
    %227 = vrot.lane.b32.xlu0 %v88, 96
    %v228 = vpop.permute.xlu0 %227
    %v230 = vsel %vm120, %v114, 0
    %v232 = vsel %vm120, %v228, 0
    %234 = vmatpush.xpose.msra.mxu0 0.0
    %235 = vmatpush.xpose.msra.mxu0 0.0
    %236 = vmatpush.xpose.msra.mxu0 0.0
    %237 = vmatpush.xpose.msra.mxu0 0.0
    %238 = vmatpush.xpose.msra.mxu0 0.0
    %239 = vmatpush.xpose.msra.mxu0 0.0
    %240 = vmatpush.xpose.msra.mxu0 0.0
    %241 = vmatpush.xpose.msra.mxu0 0.0
    %242 = vmatpush.xpose.msra.mxu0 0.0
    %243 = vmatpush.xpose.msra.mxu0 0.0
    %244 = vmatpush.xpose.msra.mxu0 0.0
    %245 = vmatpush.xpose.msra.mxu0 0.0
    %246 = vmatpush.xpose.msra.mxu0 0.0
    %247 = vmatpush.xpose.msra.mxu0 0.0
    %248 = vmatpush.xpose.msra.mxu0 0.0
    %249 = vmatpush.xpose.msra.mxu0 %v232
    %250 = vmatmul.f32.gmra.mxu0 %v230
    %v251 = vpop.f32.mrf.mxu0
    %v252 = vadd.f32 0.0, %v251
    %253 = vdwg.mxu0
    %254 = vrot.lane.b32.xlu0 %v95, 96
    %v255 = vpop.permute.xlu0 %254
    %v257 = vsel %vm120, %v115, 0
    %v259 = vsel %vm120, %v255, 0
    %261 = vmatpush.xpose.msra.mxu0 0.0
    %262 = vmatpush.xpose.msra.mxu0 0.0
    %263 = vmatpush.xpose.msra.mxu0 0.0
    %264 = vmatpush.xpose.msra.mxu0 0.0
    %265 = vmatpush.xpose.msra.mxu0 0.0
    %266 = vmatpush.xpose.msra.mxu0 0.0
    %267 = vmatpush.xpose.msra.mxu0 0.0
    %268 = vmatpush.xpose.msra.mxu0 0.0
    %269 = vmatpush.xpose.msra.mxu0 0.0
    %270 = vmatpush.xpose.msra.mxu0 0.0
    %271 = vmatpush.xpose.msra.mxu0 0.0
    %272 = vmatpush.xpose.msra.mxu0 0.0
    %273 = vmatpush.xpose.msra.mxu0 0.0
    %274 = vmatpush.xpose.msra.mxu0 0.0
    %275 = vmatpush.xpose.msra.mxu0 0.0
    %276 = vmatpush.xpose.msra.mxu0 %v259
    %277 = vmatmul.f32.gmra.mxu0 %v257
    %v278 = vpop.f32.mrf.mxu0
    %v279 = vadd.f32 0.0, %v278
    %280 = vdwg.mxu0
    %281 = vrot.lane.b32.xlu0 %v101, 96
    %v282 = vpop.permute.xlu0 %281
    %v284 = vsel %vm120, %v116, 0
    %v286 = vsel %vm120, %v282, 0
    %288 = vmatpush.xpose.msra.mxu0 0.0
    %289 = vmatpush.xpose.msra.mxu0 0.0
    %290 = vmatpush.xpose.msra.mxu0 0.0
    %291 = vmatpush.xpose.msra.mxu0 0.0
    %292 = vmatpush.xpose.msra.mxu0 0.0
    %293 = vmatpush.xpose.msra.mxu0 0.0
    %294 = vmatpush.xpose.msra.mxu0 0.0
    %295 = vmatpush.xpose.msra.mxu0 0.0
    %296 = vmatpush.xpose.msra.mxu0 0.0
    %297 = vmatpush.xpose.msra.mxu0 0.0
    %298 = vmatpush.xpose.msra.mxu0 0.0
    %299 = vmatpush.xpose.msra.mxu0 0.0
    %300 = vmatpush.xpose.msra.mxu0 0.0
    %301 = vmatpush.xpose.msra.mxu0 0.0
    %302 = vmatpush.xpose.msra.mxu0 0.0
    %303 = vmatpush.xpose.msra.mxu0 %v286
    %304 = vmatmul.f32.gmra.mxu0 %v284
    %v305 = vpop.f32.mrf.mxu0
    %v306 = vadd.f32 0.0, %v305
    %307 = vdwg.mxu0
    %308 = vrot.lane.b32.xlu0 %v107, 96
    %v309 = vpop.permute.xlu0 %308
    %v311 = vsel %vm120, %v117, 0
    %v313 = vsel %vm120, %v309, 0
    %315 = vmatpush.xpose.msra.mxu0 0.0
    %316 = vmatpush.xpose.msra.mxu0 0.0
    %317 = vmatpush.xpose.msra.mxu0 0.0
    %318 = vmatpush.xpose.msra.mxu0 0.0
    %319 = vmatpush.xpose.msra.mxu0 0.0
    %320 = vmatpush.xpose.msra.mxu0 0.0
    %321 = vmatpush.xpose.msra.mxu0 0.0
    %322 = vmatpush.xpose.msra.mxu0 0.0
    %323 = vmatpush.xpose.msra.mxu0 0.0
    %324 = vmatpush.xpose.msra.mxu0 0.0
    %325 = vmatpush.xpose.msra.mxu0 0.0
    %326 = vmatpush.xpose.msra.mxu0 0.0
    %327 = vmatpush.xpose.msra.mxu0 0.0
    %328 = vmatpush.xpose.msra.mxu0 0.0
    %329 = vmatpush.xpose.msra.mxu0 0.0
    %330 = vmatpush.xpose.msra.mxu0 %v313
    %331 = vmatmul.f32.gmra.mxu0 %v311
    %v332 = vpop.f32.mrf.mxu0
    %v333 = vadd.f32 0.0, %v332
    %334 = vdwg.mxu0
    %v335 = vsel %vm120, %v144, -inf
    %336 = vmax.xlane.f32.xlu0 %v335
    %v337 = vpop.xlane.xlu0 %336
    %v338 = vsel %vm120, %v171, -inf
    %339 = vmax.xlane.f32.xlu0 %v338
    %v340 = vpop.xlane.xlu0 %339
    %v341 = vsel %vm120, %v198, -inf
    %342 = vmax.xlane.f32.xlu0 %v341
    %v343 = vpop.xlane.xlu0 %342
    %v344 = vsel %vm120, %v225, -inf
    %345 = vmax.xlane.f32.xlu0 %v344
    %v346 = vpop.xlane.xlu0 %345
    %v347 = vsel %vm120, %v252, -inf
    %348 = vmax.xlane.f32.xlu0 %v347
    %v349 = vpop.xlane.xlu0 %348
    %v350 = vsel %vm120, %v279, -inf
    %351 = vmax.xlane.f32.xlu0 %v350
    %v352 = vpop.xlane.xlu0 %351
    %v353 = vsel %vm120, %v306, -inf
    %354 = vmax.xlane.f32.xlu0 %v353
    %v355 = vpop.xlane.xlu0 %354
    %v356 = vsel %vm120, %v333, -inf
    %357 = vmax.xlane.f32.xlu0 %v356
    %v358 = vpop.xlane.xlu0 %357
    %v359 = vsub.f32 %v144, %v337
    %v360 = vsub.f32 %v171, %v340
    %v361 = vsub.f32 %v198, %v343
    %v362 = vsub.f32 %v225, %v346
    %v363 = vsub.f32 %v252, %v349
    %v364 = vsub.f32 %v279, %v352
    %v365 = vsub.f32 %v306, %v355
    %v366 = vsub.f32 %v333, %v358
    %v367 = vmul.f32 %v359, 1.442695
    %v368 = vpow.pop %v367
    %v369 = vmul.f32 %v360, 1.442695
    %v370 = vpow.pop %v369
    %v371 = vmul.f32 %v361, 1.442695
    %v372 = vpow.pop %v371
    %v373 = vmul.f32 %v362, 1.442695
    %v374 = vpow.pop %v373
    %v375 = vmul.f32 %v363, 1.442695
    %v376 = vpow.pop %v375
    %v377 = vmul.f32 %v364, 1.442695
    %v378 = vpow.pop %v377
    %v379 = vmul.f32 %v365, 1.442695
    %v380 = vpow.pop %v379
    %v381 = vmul.f32 %v366, 1.442695
    %v382 = vpow.pop %v381
    %v383 = vsel %vm120, %v368, 0.0
    %384 = vadd.xlane.f32.xlu0 %v383
    %v385 = vpop.xlane.xlu0 %384
    %v386 = vsel %vm120, %v370, 0.0
    %387 = vadd.xlane.f32.xlu0 %v386
    %v388 = vpop.xlane.xlu0 %387
    %v389 = vsel %vm120, %v372, 0.0
    %390 = vadd.xlane.f32.xlu0 %v389
    %v391 = vpop.xlane.xlu0 %390
    %v392 = vsel %vm120, %v374, 0.0
    %393 = vadd.xlane.f32.xlu0 %v392
    %v394 = vpop.xlane.xlu0 %393
    %v395 = vsel %vm120, %v376, 0.0
    %396 = vadd.xlane.f32.xlu0 %v395
    %v397 = vpop.xlane.xlu0 %396
    %v398 = vsel %vm120, %v378, 0.0
    %399 = vadd.xlane.f32.xlu0 %v398
    %v400 = vpop.xlane.xlu0 %399
    %v401 = vsel %vm120, %v380, 0.0
    %402 = vadd.xlane.f32.xlu0 %v401
    %v403 = vpop.xlane.xlu0 %402
    %v404 = vsel %vm120, %v382, 0.0
    %405 = vadd.xlane.f32.xlu0 %v404
    %v406 = vpop.xlane.xlu0 %405
    %v407 = vrcp.pop %v385
    %v408 = vmul.f32 %v385, %v407
    %v409 = vsub.f32 1.0, %v408
    %v410 = vmul.f32 %v407, %v409
    %v411 = vadd.f32 %v407, %v410
    %vm412 = vweird.f32 %v385
    %vm413 = vweird.f32 %v407
    %vm414 = vmor %vm412, %vm413
    %v415 = vsel %vm414, %v407, %v411
    %v416 = vand.u32 2147483647, %v385
    %vm417 = vcmp.eq.f32.partialorder %v416, 8.507059e+37
    %v418 = vand.u32 %v385, 2147483648
    %v419 = vor.u32 1.1754944e-38, %v418
    %v420 = vsel %vm417, %v419, %v415
    %v421 = vrcp.pop %v388
    %v422 = vmul.f32 %v388, %v421
    %v423 = vsub.f32 1.0, %v422
    %v424 = vmul.f32 %v421, %v423
    %v425 = vadd.f32 %v421, %v424
    %vm426 = vweird.f32 %v388
    %vm427 = vweird.f32 %v421
    %vm428 = vmor %vm426, %vm427
    %v429 = vsel %vm428, %v421, %v425
    %v430 = vand.u32 2147483647, %v388
    %vm431 = vcmp.eq.f32.partialorder %v430, 8.507059e+37
    %v432 = vand.u32 %v388, 2147483648
    %v433 = vor.u32 1.1754944e-38, %v432
    %v434 = vsel %vm431, %v433, %v429
    %v435 = vrcp.pop %v391
    %v436 = vmul.f32 %v391, %v435
    %v437 = vsub.f32 1.0, %v436
    %v438 = vmul.f32 %v435, %v437
    %v439 = vadd.f32 %v435, %v438
    %vm440 = vweird.f32 %v391
    %vm441 = vweird.f32 %v435
    %vm442 = vmor %vm440, %vm441
    %v443 = vsel %vm442, %v435, %v439
    %v444 = vand.u32 2147483647, %v391
    %vm445 = vcmp.eq.f32.partialorder %v444, 8.507059e+37
    %v446 = vand.u32 %v391, 2147483648
    %v447 = vor.u32 1.1754944e-38, %v446
    %v448 = vsel %vm445, %v447, %v443
    %v449 = vrcp.pop %v394
    %v450 = vmul.f32 %v394, %v449
    %v451 = vsub.f32 1.0, %v450
    %v452 = vmul.f32 %v449, %v451
    %v453 = vadd.f32 %v449, %v452
    %vm454 = vweird.f32 %v394
    %vm455 = vweird.f32 %v449
    %vm456 = vmor %vm454, %vm455
    %v457 = vsel %vm456, %v449, %v453
    %v458 = vand.u32 2147483647, %v394
    %vm459 = vcmp.eq.f32.partialorder %v458, 8.507059e+37
    %v460 = vand.u32 %v394, 2147483648
    %v461 = vor.u32 1.1754944e-38, %v460
    %v462 = vsel %vm459, %v461, %v457
    %v463 = vrcp.pop %v397
    %v464 = vmul.f32 %v397, %v463
    %v465 = vsub.f32 1.0, %v464
    %v466 = vmul.f32 %v463, %v465
    %v467 = vadd.f32 %v463, %v466
    %vm468 = vweird.f32 %v397
    %vm469 = vweird.f32 %v463
    %vm470 = vmor %vm468, %vm469
    %v471 = vsel %vm470, %v463, %v467
    %v472 = vand.u32 2147483647, %v397
    %vm473 = vcmp.eq.f32.partialorder %v472, 8.507059e+37
    %v474 = vand.u32 %v397, 2147483648
    %v475 = vor.u32 1.1754944e-38, %v474
    %v476 = vsel %vm473, %v475, %v471
    %v477 = vrcp.pop %v400
    %v478 = vmul.f32 %v400, %v477
    %v479 = vsub.f32 1.0, %v478
    %v480 = vmul.f32 %v477, %v479
    %v481 = vadd.f32 %v477, %v480
    %vm482 = vweird.f32 %v400
    %vm483 = vweird.f32 %v477
    %vm484 = vmor %vm482, %vm483
    %v485 = vsel %vm484, %v477, %v481
    %v486 = vand.u32 2147483647, %v400
    %vm487 = vcmp.eq.f32.partialorder %v486, 8.507059e+37
    %v488 = vand.u32 %v400, 2147483648
    %v489 = vor.u32 1.1754944e-38, %v488
    %v490 = vsel %vm487, %v489, %v485
    %v491 = vrcp.pop %v403
    %v492 = vmul.f32 %v403, %v491
    %v493 = vsub.f32 1.0, %v492
    %v494 = vmul.f32 %v491, %v493
    %v495 = vadd.f32 %v491, %v494
    %vm496 = vweird.f32 %v403
    %vm497 = vweird.f32 %v491
    %vm498 = vmor %vm496, %vm497
    %v499 = vsel %vm498, %v491, %v495
    %v500 = vand.u32 2147483647, %v403
    %vm501 = vcmp.eq.f32.partialorder %v500, 8.507059e+37
    %v502 = vand.u32 %v403, 2147483648
    %v503 = vor.u32 1.1754944e-38, %v502
    %v504 = vsel %vm501, %v503, %v499
    %v505 = vrcp.pop %v406
    %v506 = vmul.f32 %v406, %v505
    %v507 = vsub.f32 1.0, %v506
    %v508 = vmul.f32 %v505, %v507
    %v509 = vadd.f32 %v505, %v508
    %vm510 = vweird.f32 %v406
    %vm511 = vweird.f32 %v505
    %vm512 = vmor %vm510, %vm511
    %v513 = vsel %vm512, %v505, %v509
    %v514 = vand.u32 2147483647, %v406
    %vm515 = vcmp.eq.f32.partialorder %v514, 8.507059e+37
    %v516 = vand.u32 %v406, 2147483648
    %v517 = vor.u32 1.1754944e-38, %v516
    %v518 = vsel %vm515, %v517, %v513
    %v519 = vmul.f32 %v368, %v420
    %v520 = vmul.f32 %v370, %v434
    %v521 = vmul.f32 %v372, %v448
    %v522 = vmul.f32 %v374, %v462
    %v523 = vmul.f32 %v376, %v476
    %v524 = vmul.f32 %v378, %v490
    %v525 = vmul.f32 %v380, %v504
    %v526 = vmul.f32 %v382, %v518
    %527 = vrot.lane.b32.xlu0 %v85, 64
    %v528 = vpop.permute.xlu0 %527
    %v531 = vsel %vm120, %v519, 0
    %533 = vmatpush.msra.mxu0 0.0
    %534 = vmatpush.msra.mxu0 0.0
    %535 = vmatpush.msra.mxu0 0.0
    %536 = vmatpush.msra.mxu0 0.0
    %537 = vmatpush.msra.mxu0 0.0
    %538 = vmatpush.msra.mxu0 0.0
    %539 = vmatpush.msra.mxu0 0.0
    %540 = vmatpush.msra.mxu0 0.0
    %541 = vmatpush.msra.mxu0 0.0
    %542 = vmatpush.msra.mxu0 0.0
    %543 = vmatpush.msra.mxu0 0.0
    %544 = vmatpush.msra.mxu0 0.0
    %545 = vmatpush.msra.mxu0 0.0
    %546 = vmatpush.msra.mxu0 0.0
    %547 = vmatpush.msra.mxu0 0.0
    %548 = vmatpush.msra.mxu0 %v528
    %549 = vmatmul.f32.gmra.mxu0 %v531
    %v550 = vpop.f32.mrf.mxu0
    %v551 = vadd.f32 0.0, %v550
    %552 = vdwg.mxu0
    %553 = vrot.lane.b32.xlu0 %v93, 64
    %v554 = vpop.permute.xlu0 %553
    %v557 = vsel %vm120, %v520, 0
    %559 = vmatpush.msra.mxu0 0.0
    %560 = vmatpush.msra.mxu0 0.0
    %561 = vmatpush.msra.mxu0 0.0
    %562 = vmatpush.msra.mxu0 0.0
    %563 = vmatpush.msra.mxu0 0.0
    %564 = vmatpush.msra.mxu0 0.0
    %565 = vmatpush.msra.mxu0 0.0
    %566 = vmatpush.msra.mxu0 0.0
    %567 = vmatpush.msra.mxu0 0.0
    %568 = vmatpush.msra.mxu0 0.0
    %569 = vmatpush.msra.mxu0 0.0
    %570 = vmatpush.msra.mxu0 0.0
    %571 = vmatpush.msra.mxu0 0.0
    %572 = vmatpush.msra.mxu0 0.0
    %573 = vmatpush.msra.mxu0 0.0
    %574 = vmatpush.msra.mxu0 %v554
    %575 = vmatmul.f32.gmra.mxu0 %v557
    %v576 = vpop.f32.mrf.mxu0
    %v577 = vadd.f32 0.0, %v576
    %578 = vdwg.mxu0
    %579 = vrot.lane.b32.xlu0 %v99, 64
    %v580 = vpop.permute.xlu0 %579
    %v583 = vsel %vm120, %v521, 0
    %585 = vmatpush.msra.mxu0 0.0
    %586 = vmatpush.msra.mxu0 0.0
    %587 = vmatpush.msra.mxu0 0.0
    %588 = vmatpush.msra.mxu0 0.0
    %589 = vmatpush.msra.mxu0 0.0
    %590 = vmatpush.msra.mxu0 0.0
    %591 = vmatpush.msra.mxu0 0.0
    %592 = vmatpush.msra.mxu0 0.0
    %593 = vmatpush.msra.mxu0 0.0
    %594 = vmatpush.msra.mxu0 0.0
    %595 = vmatpush.msra.mxu0 0.0
    %596 = vmatpush.msra.mxu0 0.0
    %597 = vmatpush.msra.mxu0 0.0
    %598 = vmatpush.msra.mxu0 0.0
    %599 = vmatpush.msra.mxu0 0.0
    %600 = vmatpush.msra.mxu0 %v580
    %601 = vmatmul.f32.gmra.mxu0 %v583
    %v602 = vpop.f32.mrf.mxu0
    %v603 = vadd.f32 0.0, %v602
    %604 = vdwg.mxu0
    %605 = vrot.lane.b32.xlu0 %v105, 64
    %v606 = vpop.permute.xlu0 %605
    %v609 = vsel %vm120, %v522, 0
    %611 = vmatpush.msra.mxu0 0.0
    %612 = vmatpush.msra.mxu0 0.0
    %613 = vmatpush.msra.mxu0 0.0
    %614 = vmatpush.msra.mxu0 0.0
    %615 = vmatpush.msra.mxu0 0.0
    %616 = vmatpush.msra.mxu0 0.0
    %617 = vmatpush.msra.mxu0 0.0
    %618 = vmatpush.msra.mxu0 0.0
    %619 = vmatpush.msra.mxu0 0.0
    %620 = vmatpush.msra.mxu0 0.0
    %621 = vmatpush.msra.mxu0 0.0
    %622 = vmatpush.msra.mxu0 0.0
    %623 = vmatpush.msra.mxu0 0.0
    %624 = vmatpush.msra.mxu0 0.0
    %625 = vmatpush.msra.mxu0 0.0
    %626 = vmatpush.msra.mxu0 %v606
    %627 = vmatmul.f32.gmra.mxu0 %v609
    %v628 = vpop.f32.mrf.mxu0
    %v629 = vadd.f32 0.0, %v628
    %630 = vdwg.mxu0
    %631 = vrot.lane.b32.xlu0 %v88, 64
    %v632 = vpop.permute.xlu0 %631
    %v635 = vsel %vm120, %v523, 0
    %637 = vmatpush.msra.mxu0 0.0
    %638 = vmatpush.msra.mxu0 0.0
    %639 = vmatpush.msra.mxu0 0.0
    %640 = vmatpush.msra.mxu0 0.0
    %641 = vmatpush.msra.mxu0 0.0
    %642 = vmatpush.msra.mxu0 0.0
    %643 = vmatpush.msra.mxu0 0.0
    %644 = vmatpush.msra.mxu0 0.0
    %645 = vmatpush.msra.mxu0 0.0
    %646 = vmatpush.msra.mxu0 0.0
    %647 = vmatpush.msra.mxu0 0.0
    %648 = vmatpush.msra.mxu0 0.0
    %649 = vmatpush.msra.mxu0 0.0
    %650 = vmatpush.msra.mxu0 0.0
    %651 = vmatpush.msra.mxu0 0.0
    %652 = vmatpush.msra.mxu0 %v632
    %653 = vmatmul.f32.gmra.mxu0 %v635
    %v654 = vpop.f32.mrf.mxu0
    %v655 = vadd.f32 0.0, %v654
    %656 = vdwg.mxu0
    %657 = vrot.lane.b32.xlu0 %v95, 64
    %v658 = vpop.permute.xlu0 %657
    %v661 = vsel %vm120, %v524, 0
    %663 = vmatpush.msra.mxu0 0.0
    %664 = vmatpush.msra.mxu0 0.0
    %665 = vmatpush.msra.mxu0 0.0
    %666 = vmatpush.msra.mxu0 0.0
    %667 = vmatpush.msra.mxu0 0.0
    %668 = vmatpush.msra.mxu0 0.0
    %669 = vmatpush.msra.mxu0 0.0
    %670 = vmatpush.msra.mxu0 0.0
    %671 = vmatpush.msra.mxu0 0.0
    %672 = vmatpush.msra.mxu0 0.0
    %673 = vmatpush.msra.mxu0 0.0
    %674 = vmatpush.msra.mxu0 0.0
    %675 = vmatpush.msra.mxu0 0.0
    %676 = vmatpush.msra.mxu0 0.0
    %677 = vmatpush.msra.mxu0 0.0
    %678 = vmatpush.msra.mxu0 %v658
    %679 = vmatmul.f32.gmra.mxu0 %v661
    %v680 = vpop.f32.mrf.mxu0
    %v681 = vadd.f32 0.0, %v680
    %682 = vdwg.mxu0
    %683 = vrot.lane.b32.xlu0 %v101, 64
    %v684 = vpop.permute.xlu0 %683
    %v687 = vsel %vm120, %v525, 0
    %689 = vmatpush.msra.mxu0 0.0
    %690 = vmatpush.msra.mxu0 0.0
    %691 = vmatpush.msra.mxu0 0.0
    %692 = vmatpush.msra.mxu0 0.0
    %693 = vmatpush.msra.mxu0 0.0
    %694 = vmatpush.msra.mxu0 0.0
    %695 = vmatpush.msra.mxu0 0.0
    %696 = vmatpush.msra.mxu0 0.0
    %697 = vmatpush.msra.mxu0 0.0
    %698 = vmatpush.msra.mxu0 0.0
    %699 = vmatpush.msra.mxu0 0.0
    %700 = vmatpush.msra.mxu0 0.0
    %701 = vmatpush.msra.mxu0 0.0
    %702 = vmatpush.msra.mxu0 0.0
    %703 = vmatpush.msra.mxu0 0.0
    %704 = vmatpush.msra.mxu0 %v684
    %705 = vmatmul.f32.gmra.mxu0 %v687
    %v706 = vpop.f32.mrf.mxu0
    %v707 = vadd.f32 0.0, %v706
    %708 = vdwg.mxu0
    %709 = vrot.lane.b32.xlu0 %v107, 64
    %v710 = vpop.permute.xlu0 %709
    %v713 = vsel %vm120, %v526, 0
    %715 = vmatpush.msra.mxu0 0.0
    %716 = vmatpush.msra.mxu0 0.0
    %717 = vmatpush.msra.mxu0 0.0
    %718 = vmatpush.msra.mxu0 0.0
    %719 = vmatpush.msra.mxu0 0.0
    %720 = vmatpush.msra.mxu0 0.0
    %721 = vmatpush.msra.mxu0 0.0
    %722 = vmatpush.msra.mxu0 0.0
    %723 = vmatpush.msra.mxu0 0.0
    %724 = vmatpush.msra.mxu0 0.0
    %725 = vmatpush.msra.mxu0 0.0
    %726 = vmatpush.msra.mxu0 0.0
    %727 = vmatpush.msra.mxu0 0.0
    %728 = vmatpush.msra.mxu0 0.0
    %729 = vmatpush.msra.mxu0 0.0
    %730 = vmatpush.msra.mxu0 %v710
    %731 = vmatmul.f32.gmra.mxu0 %v713
    %v732 = vpop.f32.mrf.mxu0
    %v733 = vadd.f32 0.0, %v732
    %734 = vdwg.mxu0
    %735 = vst.msk [vmem:[#allocation8] sm:$0xff] %vm120, %v519
    %736 = vst.msk [vmem:[#allocation8 + $0x8] sm:$0xff] %vm120, %v520
    %737 = vst.msk [vmem:[#allocation8 + $0x10] sm:$0xff] %vm120, %v521
    %738 = vst.msk [vmem:[#allocation8 + $0x18] sm:$0xff] %vm120, %v522
    %739 = vst.msk [vmem:[#allocation8 + $0x20] sm:$0xff] %vm120, %v523
    %740 = vst.msk [vmem:[#allocation8 + $0x28] sm:$0xff] %vm120, %v524
    %741 = vst.msk [vmem:[#allocation8 + $0x30] sm:$0xff] %vm120, %v525
    %742 = vst.msk [vmem:[#allocation8 + $0x38] sm:$0xff] %vm120, %v526
    %743 = vst.msk [vmem:[#allocation7] sm:$0xff] %vm120, %v551
    %744 = vst.msk [vmem:[#allocation7 + $0x8] sm:$0xff] %vm120, %v655
    %747 = vrot.lane.b32.xlu0 %v577, 8
    %v748 = vpop.permute.xlu0 %747
    %749 = vrot.lane.b32.xlu0 %v681, 8
    %v750 = vpop.permute.xlu0 %749
    %vm753 = vcmask 130112
    %754 = vst.msk [vmem:[#allocation7] sm:$0xff] %vm753, %v748
    %755 = vst.msk [vmem:[#allocation7 + $0x8] sm:$0xff] %vm753, %v750
    %758 = vrot.lane.b32.xlu0 %v603, 16
    %v759 = vpop.permute.xlu0 %758
    %760 = vrot.lane.b32.xlu0 %v707, 16
    %v761 = vpop.permute.xlu0 %760
    %vm764 = vcmask 195712
    %765 = vst.msk [vmem:[#allocation7] sm:$0xff] %vm764, %v759
    %766 = vst.msk [vmem:[#allocation7 + $0x8] sm:$0xff] %vm764, %v761
    %769 = vrot.lane.b32.xlu0 %v629, 24
    %v770 = vpop.permute.xlu0 %769
    %771 = vrot.lane.b32.xlu0 %v733, 24
    %v772 = vpop.permute.xlu0 %771
    %vm775 = vcmask 261312
    %776 = vst.msk [vmem:[#allocation7] sm:$0xff] %vm775, %v770
    %777 = vst.msk [vmem:[#allocation7 + $0x8] sm:$0xff] %vm775, %v772
    // Predicated region
    $region22: #{tpu_custom_call.1} parent=1 // pred_check
      _
    $region23: #{tpu_custom_call.1} parent=1 // pred_check_branch
      %779 = sbr.rel (0) target = $region25
    $region24: #{tpu_custom_call.1} parent=1 // pred_region
      %781 = vsyncadd [#allocation4], 0
      %s782 = sshll.u32 [#allocation7], 4
      %s783 = int_to_ptr.vmem [resolvable:$true] %s782
      %s784 = sshll.u32 %s3, 4
      %s785 = int_to_ptr.hbm [resolvable:$true] %s784
      %790 = dma.vmem_to_hbm [thread:$0]  %s783, 256, %s785, [#allocation4], 128, 128, 8
    $region25: #{tpu_custom_call.1} parent=1 // pred_fallthru
      _
    // Predicated region
    $region26: #{tpu_custom_call.1} parent=1 // pred_check
      _
    $region27: #{tpu_custom_call.1} parent=1 // pred_check_branch
      %792 = sbr.rel (0) target = $region29
    $region28: #{tpu_custom_call.1} parent=1 // pred_region
      %794 = vsyncadd [#allocation9], 0
      %s795 = sshll.u32 [#allocation8], 4
      %s796 = int_to_ptr.vmem [resolvable:$true] %s795
      %s797 = sshll.u32 %s4, 4
      %s798 = int_to_ptr.hbm [resolvable:$true] %s797
      %803 = dma.vmem_to_hbm [thread:$0]  %s796, 1024, %s798, [#allocation9], 128, 128, 8
    $region29: #{tpu_custom_call.1} parent=1 // pred_fallthru
      _
    // Predicated region
    $region30: #{tpu_custom_call.1} parent=1 // pred_check
      _
    $region31: #{tpu_custom_call.1} parent=1 // pred_check_branch
      %805 = sbr.rel (0) target = $region33
    $region32: #{tpu_custom_call.1} parent=1 // pred_region
      %807 = dma.done [#allocation4], 256
    $region33: #{tpu_custom_call.1} parent=1 // pred_fallthru
      _
    // Predicated region
    $region34: #{tpu_custom_call.1} parent=1 // pred_check
      _
    $region35: #{tpu_custom_call.1} parent=1 // pred_check_branch
      %809 = sbr.rel (0) target = $region37
    $region36: #{tpu_custom_call.1} parent=1 // pred_region
      %811 = dma.done [#allocation9], 1024
    $region37: #{tpu_custom_call.1} parent=1 // pred_fallthru
      _
    %812 = vsyncpa [#allocation3], 1
    %813 = vsyncpa [#allocation6], 1
    %814 = vsyncpa [#allocation4], 1
    %815 = vsyncpa [#allocation9], 1

</llo_original>
